<compile_context>
chip_gen: v5e
topology: v5e:2x2
jax: 0.10.0
libtpu: 0.0.40
codegen_flags: <defaults>
</compile_context>

<pallas_src>
import jax
import jax.numpy as jnp
from jax.experimental import pallas as pl
from jax.experimental.pallas import tpu as pltpu

_LANES = 128                      # TPU lane width (last vreg dim)
_TARGET_BLOCK_BYTES = 4 << 20     # ~4 MiB per block (dtype-independent)
_SINGLE_BLOCK_MAX_ROWS = 1024     # tiny inputs: one full-extent block
_MIN_GRID_BLOCKS = 4              # mid-size inputs: >=4 blocks for megacore


def _lambda_fn(x):
    # The concrete "lambda_function": elementwise x * 2.0 + 1.0.
    # (Python-float constants are weakly typed, so bf16/f32 inputs stay in
    #  their own dtype.)
    return x * 2.0 + 1.0


def _lambda_kernel(x_ref, o_ref):
    # Exactly one store per tile.
    o_ref[...] = _lambda_fn(x_ref[...])


def _round_up(n, m):
    return (n + m - 1) // m * m


def _run_kernel_2d(x2d: jax.Array) -> jax.Array:
    """Run the lambda kernel over a lane-dense (rows, 128) slab."""
    rows, lanes = x2d.shape
    dtype_bytes = jnp.dtype(x2d.dtype).itemsize

    # Keep the block ~4 MiB regardless of dtype (8192 rows f32, 16384 bf16).
    max_block_rows = max(8, _TARGET_BLOCK_BYTES // (lanes * dtype_bytes))
    max_block_rows = _round_up(max_block_rows, 8)

    if rows <= _SINGLE_BLOCK_MAX_ROWS:
        # Single block equal to the full array (allowed by the
        # "(8,128)-divisible OR full-extent" rule) — no pipeline overhead.
        block_rows = rows
        grid = (1,)
    else:
        # Aim for at least _MIN_GRID_BLOCKS blocks so v7x megacore sharding
        # engages, but never exceed the ~4 MiB block-byte target.
        block_rows = min(max_block_rows,
                         _round_up(pl.cdiv(rows, _MIN_GRID_BLOCKS), 8))
        grid = (pl.cdiv(rows, block_rows),)   # ragged last block is masked

    return pl.pallas_call(
        _lambda_kernel,
        out_shape=jax.ShapeDtypeStruct((rows, lanes), x2d.dtype),
        grid_spec=pltpu.PrefetchScalarGridSpec(
            num_scalar_prefetch=0,
            grid=grid,
            in_specs=[pl.BlockSpec((block_rows, lanes), lambda i: (i, 0))],
            out_specs=pl.BlockSpec((block_rows, lanes), lambda i: (i, 0)),
        ),
        compiler_params=pltpu.CompilerParams(
            # Elementwise & data-parallel: v7x's two TensorCores split the
            # grid.  No-op on single-TC chips (v5e/v6e).
            dimension_semantics=("parallel",),
            # Double-buffered in+out at 4 MiB blocks = 16 MiB resident, which
            # exactly hits v5e's 16 MiB default scoped limit — raise it.
            vmem_limit_bytes=32 << 20,
        ),
    )(x2d)


def lambda_layer(x: jax.Array) -> jax.Array:
    """Apply LambdaLayer(lambda x: x * 2.0 + 1.0) via a Pallas TPU kernel.

    Accepts any shape; computation is elementwise.  Internally the array is
    presented to the kernel as a lane-dense (rows, 128) slab with no
    whole-array pad/slice copies.
    """
    orig_shape = x.shape
    total = x.size
    if total == 0:
        return x

    if not jnp.issubdtype(x.dtype, jnp.floating):
        # TODO(synk): integer inputs promote under `* 2.0 + 1.0`; mirror
        # PyTorch's promotion in plain jnp rather than in the float kernel.
        return _lambda_fn(x)

    flat = x.reshape(-1)                      # zero-copy for contiguous input
    bulk = (total // _LANES) * _LANES

    if bulk == total:
        # 128-aligned: zero-copy reshape, no padding, no trailing slice.
        out2d = _run_kernel_2d(flat.reshape(total // _LANES, _LANES))
        return out2d.reshape(orig_shape)

    # Non-aligned: kernel handles the aligned bulk; the <128-element tail is
    # computed with plain jnp in the wrapper (no whole-array pad/slice).
    parts = []
    if bulk:
        bulk2d = _run_kernel_2d(flat[:bulk].reshape(bulk // _LANES, _LANES))
        parts.append(bulk2d.reshape(-1))
    parts.append(_lambda_fn(flat[bulk:]))
    out = jnp.concatenate(parts) if len(parts) > 1 else parts[0]
    return out.reshape(orig_shape)


def _reference(x: jax.Array) -> jax.Array:
    return x * 2.0 + 1.0


if __name__ == "__main__":
    key = jax.random.PRNGKey(0)

    # Primary case: NCHW input matching the module's usage, small shapes.
    x = jax.random.normal(key, (2, 4, 16, 16), dtype=jnp.float32)
    y = lambda_layer(x)
    jax.block_until_ready(y)
    assert y.shape == x.shape and y.dtype == x.dtype
    assert jnp.allclose(y, _reference(x), atol=1e-6, rtol=1e-6)

    # Secondary check: numel not a multiple of 128 (bulk + jnp tail path).
    k1, k2 = jax.random.split(key)
    x_odd = jax.random.normal(k1, (3, 5, 7, 11), dtype=jnp.float32)
    y_odd = lambda_layer(x_odd)
    jax.block_until_ready(y_odd)
    assert jnp.allclose(y_odd, _reference(x_odd), atol=1e-6, rtol=1e-6)

    # Tertiary check: large enough to exercise the multi-block tiled grid
    # (1280 rows -> 4 blocks, ragged-safe).
    x_big = jax.random.normal(k2, (2, 4, 128, 160), dtype=jnp.float32)
    y_big = lambda_layer(x_big)
    jax.block_until_ready(y_big)
    assert jnp.allclose(y_big, _reference(x_big), atol=1e-6, rtol=1e-6)

    print("KERNEL_OK")
</pallas_src>

<mosaic_0001>
module attributes {stable_mosaic.version = 11 : i64} {
  func.func @_lambda_kernel(%arg0: i32, %arg1: memref<16x128xf32, #tpu.memory_space<vmem>>, %arg2: memref<16x128xf32, #tpu.memory_space<vmem>>) attributes {dimension_semantics = [#tpu.dimension_semantics<parallel>], iteration_bounds = array<i64: 1>, scalar_prefetch = 0 : i64, scratch_operands = 0 : i64, tpu.core_type = #tpu.core_type<tc>, window_params = [{transform_indices = @transform_0, window_bounds = array<i64: 16, 128>}, {transform_indices = @transform_1, window_bounds = array<i64: 16, 128>}]} {
    %c0 = arith.constant 0 : index
    %c0_0 = arith.constant 0 : index
    %0 = vector.load %arg1[%c0, %c0_0] : memref<16x128xf32, #tpu.memory_space<vmem>>, vector<16x128xf32>
    %cst = arith.constant 2.000000e+00 : f32
    %1 = vector.broadcast %cst : f32 to vector<16x128xf32>
    %2 = arith.mulf %0, %1 : vector<16x128xf32>
    %cst_1 = arith.constant 1.000000e+00 : f32
    %3 = vector.broadcast %cst_1 : f32 to vector<16x128xf32>
    %4 = arith.addf %2, %3 : vector<16x128xf32>
    %c0_2 = arith.constant 0 : index
    %c0_3 = arith.constant 0 : index
    %5 = vector.load %arg2[%c0_2, %c0_3] : memref<16x128xf32, #tpu.memory_space<vmem>>, vector<16x128xf32>
    tpu.vector_store %arg2[%c0_2, %c0_3], %4 {strides = array<i32>} : memref<16x128xf32, #tpu.memory_space<vmem>>, vector<16x128xf32>,
    return
  }
  func.func @transform_0(%arg0: i32) -> (i32, i32) {
    %c0_i32 = arith.constant 0 : i32
    %c0_i32_0 = arith.constant 0 : i32
    return %arg0, %c0_i32 : i32, i32
  }
  func.func @transform_1(%arg0: i32) -> (i32, i32) {
    %c0_i32 = arith.constant 0 : i32
    %c0_i32_0 = arith.constant 0 : i32
    return %arg0, %c0_i32 : i32, i32
  }
}

</mosaic_0001>

<llo_original>
// kernel: tpu_custom_call.1
$region0: #{tpu_custom_call.1}
  #allocation0 [shape = 'u32[]', space=smem, size = 0x4, offset = 0x4, fixed_abs, tag = 'smem constant byte address 0x4 - core index']
  #allocation1 [shape = 'u32[72,128]{1,0:T(1,128)}', space=vmem, size = 0x9000, scoped, tag = 'internal scratch']
  %s0 = inlined_call_operand.hbm [shape: f32[16,128], index: 0, kind: input, shape index: {}]
  %s1 = inlined_call_operand.hbm [shape: f32[16,128], index: 1, kind: output, shape index: {}]
  %s2 = sld [smem:[#allocation0]]
  $region18: #{tpu_custom_call.1} parent=0
    _
  %s4 = ssub.s32 1, %s2
  %s5 = scalar_select 0, %s4, %s2
  $region1: #{tpu_custom_call.1} parent=0
    #allocation2 [shape = 'u8[8192]{0}', space=vmem, size = 0x2000, scoped, tag = 'input window, operand 0, single buffered']
    #allocation3 [shape = 's32[1]{0}', space=sflag, size = 0x4, scoped, tag = 'scoped memory for tpu_custom_call.1']
    #allocation4 [shape = 's32[1]{0}', space=sflag, size = 0x4, scoped, tag = 'scoped memory for tpu_custom_call.1']
    #allocation5 [shape = 'u8[8192]{0}', space=vmem, size = 0x2000, scoped, tag = 'output window, operand 0, single buffered']
    %6 = vsyncpa [#allocation3], 0
    %7 = vsyncpa [#allocation4], 0
    // Predicated region
    $region2: #{tpu_custom_call.1} parent=1 // pred_check
      _
    $region3: #{tpu_custom_call.1} parent=1 // pred_check_branch
      %9 = sbr.rel (0) target = $region5
    $region4: #{tpu_custom_call.1} parent=1 // pred_region
      %11 = vsyncadd [#allocation3], 0
      %s12 = sshll.u32 %s0, 4
      %s13 = int_to_ptr.hbm [resolvable:$true] %s12
      %s14 = sshll.u32 [#allocation2], 4
      %s15 = int_to_ptr.vmem [resolvable:$true] %s14
      %20 = dma.hbm_to_vmem [thread:$0]  %s13, 256, %s15, [#allocation3], 128, 128, 8
    $region5: #{tpu_custom_call.1} parent=1 // pred_fallthru
      _
    // Predicated region
    $region6: #{tpu_custom_call.1} parent=1 // pred_check
      _
    $region7: #{tpu_custom_call.1} parent=1 // pred_check_branch
      %22 = sbr.rel (0) target = $region9
    $region8: #{tpu_custom_call.1} parent=1 // pred_region
      %24 = dma.done [#allocation3], 256
    $region9: #{tpu_custom_call.1} parent=1 // pred_fallthru
      _
    %v25 = vld [vmem:[#allocation2] sm:$0xff]
    %v26 = vld [vmem:[#allocation2 + $0x8] sm:$0xff]
    %v27 = vmul.f32 %v25, 2.0
    %v28 = vmul.f32 %v26, 2.0
    %v29 = vadd.f32 %v27, 1.0
    %v30 = vadd.f32 %v28, 1.0
    %31 = vst [vmem:[#allocation5] sm:$0xff] %v29
    %32 = vst [vmem:[#allocation5 + $0x8] sm:$0xff] %v30
    // Predicated region
    $region10: #{tpu_custom_call.1} parent=1 // pred_check
      _
    $region11: #{tpu_custom_call.1} parent=1 // pred_check_branch
      %34 = sbr.rel (0) target = $region13
    $region12: #{tpu_custom_call.1} parent=1 // pred_region
      %36 = vsyncadd [#allocation4], 0
      %s37 = sshll.u32 [#allocation5], 4
      %s38 = int_to_ptr.vmem [resolvable:$true] %s37
      %s39 = sshll.u32 %s1, 4
      %s40 = int_to_ptr.hbm [resolvable:$true] %s39
      %45 = dma.vmem_to_hbm [thread:$0]  %s38, 256, %s40, [#allocation4], 128, 128, 8
    $region13: #{tpu_custom_call.1} parent=1 // pred_fallthru
      _
    // Predicated region
    $region14: #{tpu_custom_call.1} parent=1 // pred_check
      _
    $region15: #{tpu_custom_call.1} parent=1 // pred_check_branch
      %47 = sbr.rel (0) target = $region17
    $region16: #{tpu_custom_call.1} parent=1 // pred_region
      %49 = dma.done [#allocation4], 256
    $region17: #{tpu_custom_call.1} parent=1 // pred_fallthru
      _
    %50 = vsyncpa [#allocation3], 1
    %51 = vsyncpa [#allocation4], 1

</llo_original>
